<compile_context>
chip_gen: v7x
topology: tpu7x:2x2x1
jax: 0.10.0
libtpu: 0.0.40
codegen_flags: <defaults>
</compile_context>

<pallas_src>
import numpy as np
import jax
import jax.numpy as jnp
from jax.experimental import pallas as pl
from jax.experimental.pallas import tpu as pltpu

ROUTING_ITERS = 3


def digit_capsule_kernel(u_ref, w_ref, out_ref):
    # u_ref   : (B_TILE, P, D)   previous-layer capsules, D on lanes
    # w_ref   : (1, C, P, D)     transform weights of output capsule j, D on lanes
    # out_ref : (1, B_TILE, C)   v_j for output capsule j, this batch tile
    u = u_ref[...].astype(jnp.float32)       # (B, P, D)
    W = w_ref[0].astype(jnp.float32)         # (C, P, D)
    B, P, D = u.shape
    C = W.shape[0]

    # u_hat[b, c, d] = sum_p u[b, p, d] * W[c, p, d]
    # P is small (8) and static -> unrolled lane-dense FMAs on (B, C, D) tiles.
    u_hat = u[:, 0, :][:, None, :] * W[None, :, 0, :]
    for p in range(1, P):
        u_hat = u_hat + u[:, p, :][:, None, :] * W[None, :, p, :]

    # Routing logits: (B, D) only -- each C-slice of the PyTorch b_ij is identical.
    b_ij = jnp.zeros((B, D), jnp.float32)
    v_j = jnp.zeros((B, C), jnp.float32)
    for it in range(ROUTING_ITERS):
        # softmax over the previous-capsule axis d (lane axis; reductions on XLU)
        b_max = jnp.max(b_ij, axis=-1, keepdims=True)              # (B, 1)
        e = jnp.exp(b_ij - b_max)                                  # (B, D)  EUP
        inv_den = pl.reciprocal(jnp.sum(e, axis=-1, keepdims=True))  # (B, 1) exact
        c_ij = e * inv_den                                         # (B, D)

        # s_j[b, c] = sum_d c_ij[b, d] * u_hat[b, c, d]
        s_j = jnp.sum(c_ij[:, None, :] * u_hat, axis=-1)           # (B, C)

        # squash over the capsule dim: v = s * sqrt(|s|^2) / (1 + |s|^2)
        # (no epsilon, to match the PyTorch reference exactly)
        sq = jnp.sum(s_j * s_j, axis=-1, keepdims=True)            # (B, 1)
        scale = jnp.sqrt(sq) * pl.reciprocal(1.0 + sq)             # (B, 1)
        v_j = s_j * scale                                          # (B, C)

        if it < ROUTING_ITERS - 1:
            # agreement a_ij[b, d] = sum_c u_hat[b, c, d] * v_j[b, c]
            a_ij = jnp.sum(u_hat * v_j[:, :, None], axis=1)        # (B, D)
            b_ij = b_ij + a_ij

    out_ref[0] = v_j


def digit_capsule_forward(u, W, *, b_tile=None):
    """u: (B, D, P) f32, W: (J, D, P, C) f32  ->  (J, B, 1, 1, C) f32.

    u / W use the original PyTorch layouts; the lane-dense transpose is done here
    (layout plumbing that in a real model would be folded into param init).
    """
    B, D, P = u.shape
    J, Dw, Pw, C = W.shape
    assert (Dw, Pw) == (D, P)

    # Lane-dense re-layout: D on the minor (lane) axis everywhere.
    u_t = jnp.transpose(u, (0, 2, 1))         # (B, P, D)
    W_t = jnp.transpose(W, (0, 3, 2, 1))      # (J, C, P, D)

    if b_tile is None:
        # <=32 keeps the per-step live set well under v7x's 32 MiB scoped VMEM at
        # production shapes (B=128, D=1152); bump toward 64-128 on v5e/v6e.
        b_tile = min(B, 32)
    assert B % b_tile == 0, "batch must be divisible by the batch tile"
    nb = B // b_tile

    flops = (2 * J * B * D * P * C                      # u_hat FMAs
             + ROUTING_ITERS * 2 * J * B * D * C        # s_j
             + (ROUTING_ITERS - 1) * 2 * J * B * D * C  # a_ij
             + ROUTING_ITERS * 4 * J * B * D)           # softmax adds/muls
    transcendentals = ROUTING_ITERS * J * B * (D + 2)   # exp + recip/sqrt
    bytes_accessed = 4 * (J * B * P * D + J * C * P * D + J * B * C)

    out = pl.pallas_call(
        digit_capsule_kernel,
        out_shape=jax.ShapeDtypeStruct((J, B, C), jnp.float32),
        grid=(J, nb),
        in_specs=[
            pl.BlockSpec((b_tile, P, D), lambda j, b: (b, 0, 0)),     # u batch tile
            pl.BlockSpec((1, C, P, D), lambda j, b: (j, 0, 0, 0)),    # W[j]
        ],
        out_specs=pl.BlockSpec((1, b_tile, C), lambda j, b: (j, b, 0)),
        compiler_params=pltpu.CompilerParams(
            dimension_semantics=("parallel", "parallel"),
            vmem_limit_bytes=32 * 1024 * 1024),
        cost_estimate=pl.CostEstimate(
            flops=flops,
            transcendentals=transcendentals,
            bytes_accessed=bytes_accessed),
    )(u_t, W_t)
    return out.reshape(J, B, 1, 1, C)


def reference_forward(u, W):
    """Pure-JAX transcription of the PyTorch forward for correctness checking."""
    u_e = u[None, :, :, None, :]                  # (1, B, D, 1, P)
    W_e = W[:, None, :, :, :]                     # (J, 1, D, P, C)
    u_hat = jnp.matmul(u_e, W_e)                  # (J, B, D, 1, C)
    b_ij = jnp.zeros_like(u_hat)
    v_j = None
    for it in range(ROUTING_ITERS):
        c_ij = jax.nn.softmax(b_ij, axis=2)                     # transpose_softmax(dim=2)
        s_j = jnp.sum(c_ij * u_hat, axis=2, keepdims=True)      # (J, B, 1, 1, C)
        sq = jnp.sum(s_j ** 2, axis=-1, keepdims=True)
        v_j = (sq / (1.0 + sq)) * s_j / jnp.sqrt(sq)            # squash
        if it < ROUTING_ITERS - 1:
            a_ij = jnp.sum(u_hat * v_j, axis=-1, keepdims=True)
            b_ij = b_ij + a_ij
    return v_j                                                  # (J, B, 1, 1, C)


if __name__ == "__main__":
    # Small but structurally faithful shapes:
    #   num_capsule J=4, num_cap_prev P=8, cap_dim C=16, cap_dim_prev D=128, batch B=2
    B, D, P = 2, 128, 8
    J, C = 4, 16

    key = jax.random.PRNGKey(0)
    k_u, k_w = jax.random.split(key)
    u = jax.random.normal(k_u, (B, D, P), dtype=jnp.float32)      # previous capsule outputs
    W = jax.random.normal(k_w, (J, D, P, C), dtype=jnp.float32)   # torch.randn-style init

    v_kernel = jax.block_until_ready(digit_capsule_forward(u, W))

    v_ref = reference_forward(u, W)
    np.testing.assert_allclose(np.asarray(v_kernel), np.asarray(v_ref),
                               rtol=1e-4, atol=1e-4)
    assert v_kernel.shape == (J, B, 1, 1, C)
    print("KERNEL_OK")
</pallas_src>

<mosaic_0001>
module attributes {stable_mosaic.version = 11 : i64} {
  func.func @digit_capsule_kernel(%arg0: i32, %arg1: i32, %arg2: memref<2x8x128xf32, #tpu.memory_space<vmem>>, %arg3: memref<1x16x8x128xf32, #tpu.memory_space<vmem>>, %arg4: memref<1x2x16xf32, #tpu.memory_space<vmem>>) attributes {dimension_semantics = [#tpu.dimension_semantics<parallel>, #tpu.dimension_semantics<parallel>], iteration_bounds = array<i64: 4, 1>, scalar_prefetch = 0 : i64, scratch_operands = 0 : i64, tpu.core_type = #tpu.core_type<tc>, window_params = [{transform_indices = @transform_0, window_bounds = array<i64: 2, 8, 128>}, {transform_indices = @transform_1, window_bounds = array<i64: 1, 16, 8, 128>}, {transform_indices = @transform_2, window_bounds = array<i64: 1, 2, 16>}]} {
    %c0 = arith.constant 0 : index
    %c0_0 = arith.constant 0 : index
    %c0_1 = arith.constant 0 : index
    %0 = vector.load %arg2[%c0, %c0_0, %c0_1] : memref<2x8x128xf32, #tpu.memory_space<vmem>>, vector<2x8x128xf32>
    %c0_2 = arith.constant 0 : index
    %c0_3 = arith.constant 0 : index
    %c0_4 = arith.constant 0 : index
    %c0_5 = arith.constant 0 : index
    %1 = vector.load %arg3[%c0_2, %c0_3, %c0_4, %c0_5] : memref<1x16x8x128xf32, #tpu.memory_space<vmem>>, vector<1x16x8x128xf32>
    %2 = vector.shape_cast %1 : vector<1x16x8x128xf32> to vector<16x8x128xf32>
    %3 = vector.extract_strided_slice %0 {offsets = [0, 0, 0], sizes = [2, 1, 128], strides = [1, 1, 1]} : vector<2x8x128xf32> to vector<2x1x128xf32>
    %4 = vector.shape_cast %3 : vector<2x1x128xf32> to vector<2x128xf32>
    %5 = vector.shape_cast %4 : vector<2x128xf32> to vector<2x1x128xf32>
    %6 = vector.extract_strided_slice %2 {offsets = [0, 0, 0], sizes = [16, 1, 128], strides = [1, 1, 1]} : vector<16x8x128xf32> to vector<16x1x128xf32>
    %7 = vector.shape_cast %6 : vector<16x1x128xf32> to vector<16x128xf32>
    %8 = vector.shape_cast %7 : vector<16x128xf32> to vector<1x16x128xf32>
    %9 = vector.broadcast %5 : vector<2x1x128xf32> to vector<2x16x128xf32>
    %10 = vector.broadcast %8 : vector<1x16x128xf32> to vector<2x16x128xf32>
    %11 = arith.mulf %9, %10 : vector<2x16x128xf32>
    %12 = vector.extract_strided_slice %0 {offsets = [0, 1, 0], sizes = [2, 1, 128], strides = [1, 1, 1]} : vector<2x8x128xf32> to vector<2x1x128xf32>
    %13 = vector.shape_cast %12 : vector<2x1x128xf32> to vector<2x128xf32>
    %14 = vector.shape_cast %13 : vector<2x128xf32> to vector<2x1x128xf32>
    %15 = vector.extract_strided_slice %2 {offsets = [0, 1, 0], sizes = [16, 1, 128], strides = [1, 1, 1]} : vector<16x8x128xf32> to vector<16x1x128xf32>
    %16 = vector.shape_cast %15 : vector<16x1x128xf32> to vector<16x128xf32>
    %17 = vector.shape_cast %16 : vector<16x128xf32> to vector<1x16x128xf32>
    %18 = vector.broadcast %14 : vector<2x1x128xf32> to vector<2x16x128xf32>
    %19 = vector.broadcast %17 : vector<1x16x128xf32> to vector<2x16x128xf32>
    %20 = arith.mulf %18, %19 : vector<2x16x128xf32>
    %21 = arith.addf %11, %20 : vector<2x16x128xf32>
    %22 = vector.extract_strided_slice %0 {offsets = [0, 2, 0], sizes = [2, 1, 128], strides = [1, 1, 1]} : vector<2x8x128xf32> to vector<2x1x128xf32>
    %23 = vector.shape_cast %22 : vector<2x1x128xf32> to vector<2x128xf32>
    %24 = vector.shape_cast %23 : vector<2x128xf32> to vector<2x1x128xf32>
    %25 = vector.extract_strided_slice %2 {offsets = [0, 2, 0], sizes = [16, 1, 128], strides = [1, 1, 1]} : vector<16x8x128xf32> to vector<16x1x128xf32>
    %26 = vector.shape_cast %25 : vector<16x1x128xf32> to vector<16x128xf32>
    %27 = vector.shape_cast %26 : vector<16x128xf32> to vector<1x16x128xf32>
    %28 = vector.broadcast %24 : vector<2x1x128xf32> to vector<2x16x128xf32>
    %29 = vector.broadcast %27 : vector<1x16x128xf32> to vector<2x16x128xf32>
    %30 = arith.mulf %28, %29 : vector<2x16x128xf32>
    %31 = arith.addf %21, %30 : vector<2x16x128xf32>
    %32 = vector.extract_strided_slice %0 {offsets = [0, 3, 0], sizes = [2, 1, 128], strides = [1, 1, 1]} : vector<2x8x128xf32> to vector<2x1x128xf32>
    %33 = vector.shape_cast %32 : vector<2x1x128xf32> to vector<2x128xf32>
    %34 = vector.shape_cast %33 : vector<2x128xf32> to vector<2x1x128xf32>
    %35 = vector.extract_strided_slice %2 {offsets = [0, 3, 0], sizes = [16, 1, 128], strides = [1, 1, 1]} : vector<16x8x128xf32> to vector<16x1x128xf32>
    %36 = vector.shape_cast %35 : vector<16x1x128xf32> to vector<16x128xf32>
    %37 = vector.shape_cast %36 : vector<16x128xf32> to vector<1x16x128xf32>
    %38 = vector.broadcast %34 : vector<2x1x128xf32> to vector<2x16x128xf32>
    %39 = vector.broadcast %37 : vector<1x16x128xf32> to vector<2x16x128xf32>
    %40 = arith.mulf %38, %39 : vector<2x16x128xf32>
    %41 = arith.addf %31, %40 : vector<2x16x128xf32>
    %42 = vector.extract_strided_slice %0 {offsets = [0, 4, 0], sizes = [2, 1, 128], strides = [1, 1, 1]} : vector<2x8x128xf32> to vector<2x1x128xf32>
    %43 = vector.shape_cast %42 : vector<2x1x128xf32> to vector<2x128xf32>
    %44 = vector.shape_cast %43 : vector<2x128xf32> to vector<2x1x128xf32>
    %45 = vector.extract_strided_slice %2 {offsets = [0, 4, 0], sizes = [16, 1, 128], strides = [1, 1, 1]} : vector<16x8x128xf32> to vector<16x1x128xf32>
    %46 = vector.shape_cast %45 : vector<16x1x128xf32> to vector<16x128xf32>
    %47 = vector.shape_cast %46 : vector<16x128xf32> to vector<1x16x128xf32>
    %48 = vector.broadcast %44 : vector<2x1x128xf32> to vector<2x16x128xf32>
    %49 = vector.broadcast %47 : vector<1x16x128xf32> to vector<2x16x128xf32>
    %50 = arith.mulf %48, %49 : vector<2x16x128xf32>
    %51 = arith.addf %41, %50 : vector<2x16x128xf32>
    %52 = vector.extract_strided_slice %0 {offsets = [0, 5, 0], sizes = [2, 1, 128], strides = [1, 1, 1]} : vector<2x8x128xf32> to vector<2x1x128xf32>
    %53 = vector.shape_cast %52 : vector<2x1x128xf32> to vector<2x128xf32>
    %54 = vector.shape_cast %53 : vector<2x128xf32> to vector<2x1x128xf32>
    %55 = vector.extract_strided_slice %2 {offsets = [0, 5, 0], sizes = [16, 1, 128], strides = [1, 1, 1]} : vector<16x8x128xf32> to vector<16x1x128xf32>
    %56 = vector.shape_cast %55 : vector<16x1x128xf32> to vector<16x128xf32>
    %57 = vector.shape_cast %56 : vector<16x128xf32> to vector<1x16x128xf32>
    %58 = vector.broadcast %54 : vector<2x1x128xf32> to vector<2x16x128xf32>
    %59 = vector.broadcast %57 : vector<1x16x128xf32> to vector<2x16x128xf32>
    %60 = arith.mulf %58, %59 : vector<2x16x128xf32>
    %61 = arith.addf %51, %60 : vector<2x16x128xf32>
    %62 = vector.extract_strided_slice %0 {offsets = [0, 6, 0], sizes = [2, 1, 128], strides = [1, 1, 1]} : vector<2x8x128xf32> to vector<2x1x128xf32>
    %63 = vector.shape_cast %62 : vector<2x1x128xf32> to vector<2x128xf32>
    %64 = vector.shape_cast %63 : vector<2x128xf32> to vector<2x1x128xf32>
    %65 = vector.extract_strided_slice %2 {offsets = [0, 6, 0], sizes = [16, 1, 128], strides = [1, 1, 1]} : vector<16x8x128xf32> to vector<16x1x128xf32>
    %66 = vector.shape_cast %65 : vector<16x1x128xf32> to vector<16x128xf32>
    %67 = vector.shape_cast %66 : vector<16x128xf32> to vector<1x16x128xf32>
    %68 = vector.broadcast %64 : vector<2x1x128xf32> to vector<2x16x128xf32>
    %69 = vector.broadcast %67 : vector<1x16x128xf32> to vector<2x16x128xf32>
    %70 = arith.mulf %68, %69 : vector<2x16x128xf32>
    %71 = arith.addf %61, %70 : vector<2x16x128xf32>
    %72 = vector.extract_strided_slice %0 {offsets = [0, 7, 0], sizes = [2, 1, 128], strides = [1, 1, 1]} : vector<2x8x128xf32> to vector<2x1x128xf32>
    %73 = vector.shape_cast %72 : vector<2x1x128xf32> to vector<2x128xf32>
    %74 = vector.shape_cast %73 : vector<2x128xf32> to vector<2x1x128xf32>
    %75 = vector.extract_strided_slice %2 {offsets = [0, 7, 0], sizes = [16, 1, 128], strides = [1, 1, 1]} : vector<16x8x128xf32> to vector<16x1x128xf32>
    %76 = vector.shape_cast %75 : vector<16x1x128xf32> to vector<16x128xf32>
    %77 = vector.shape_cast %76 : vector<16x128xf32> to vector<1x16x128xf32>
    %78 = vector.broadcast %74 : vector<2x1x128xf32> to vector<2x16x128xf32>
    %79 = vector.broadcast %77 : vector<1x16x128xf32> to vector<2x16x128xf32>
    %80 = arith.mulf %78, %79 : vector<2x16x128xf32>
    %81 = arith.addf %71, %80 : vector<2x16x128xf32>
    %cst = arith.constant 0.000000e+00 : f32
    %82 = vector.broadcast %cst : f32 to vector<2x128xf32>
    %cst_6 = arith.constant dense<0xFF800000> : vector<2xf32>
    %83 = vector.multi_reduction <maximumf>, %82, %cst_6 [1] : vector<2x128xf32> to vector<2xf32>
    %84 = vector.shape_cast %83 : vector<2xf32> to vector<2x1xf32>
    %85 = vector.broadcast %84 : vector<2x1xf32> to vector<2x128xf32>
    %86 = arith.subf %82, %85 : vector<2x128xf32>
    %87 = math.exp %86 : vector<2x128xf32>
    %cst_7 = arith.constant dense<0.000000e+00> : vector<2xf32>
    %88 = vector.multi_reduction <add>, %87, %cst_7 [1] : vector<2x128xf32> to vector<2xf32>
    %89 = vector.shape_cast %88 : vector<2xf32> to vector<2x1xf32>
    %90 = tpu.reciprocal %89 : vector<2x1xf32> -> vector<2x1xf32>
    %91 = vector.broadcast %90 : vector<2x1xf32> to vector<2x128xf32>
    %92 = arith.mulf %87, %91 : vector<2x128xf32>
    %93 = vector.shape_cast %92 : vector<2x128xf32> to vector<2x1x128xf32>
    %94 = vector.broadcast %93 : vector<2x1x128xf32> to vector<2x16x128xf32>
    %95 = arith.mulf %94, %81 : vector<2x16x128xf32>
    %cst_8 = arith.constant dense<0.000000e+00> : vector<2x16xf32>
    %96 = vector.multi_reduction <add>, %95, %cst_8 [2] : vector<2x16x128xf32> to vector<2x16xf32>
    %97 = arith.mulf %96, %96 : vector<2x16xf32>
    %cst_9 = arith.constant dense<0.000000e+00> : vector<2xf32>
    %98 = vector.multi_reduction <add>, %97, %cst_9 [1] : vector<2x16xf32> to vector<2xf32>
    %99 = vector.shape_cast %98 : vector<2xf32> to vector<2x1xf32>
    %100 = math.sqrt %99 : vector<2x1xf32>
    %cst_10 = arith.constant 1.000000e+00 : f32
    %101 = vector.broadcast %cst_10 : f32 to vector<2x1xf32>
    %102 = arith.addf %101, %99 : vector<2x1xf32>
    %103 = tpu.reciprocal %102 : vector<2x1xf32> -> vector<2x1xf32>
    %104 = arith.mulf %100, %103 : vector<2x1xf32>
    %105 = vector.broadcast %104 : vector<2x1xf32> to vector<2x16xf32>
    %106 = arith.mulf %96, %105 : vector<2x16xf32>
    %107 = vector.shape_cast %106 : vector<2x16xf32> to vector<2x16x1xf32>
    %108 = vector.broadcast %107 : vector<2x16x1xf32> to vector<2x16x128xf32>
    %109 = arith.mulf %81, %108 : vector<2x16x128xf32>
    %cst_11 = arith.constant dense<0.000000e+00> : vector<2x128xf32>
    %110 = vector.multi_reduction <add>, %109, %cst_11 [1] : vector<2x16x128xf32> to vector<2x128xf32>
    %111 = arith.addf %82, %110 : vector<2x128xf32>
    %cst_12 = arith.constant dense<0xFF800000> : vector<2xf32>
    %112 = vector.multi_reduction <maximumf>, %111, %cst_12 [1] : vector<2x128xf32> to vector<2xf32>
    %113 = vector.shape_cast %112 : vector<2xf32> to vector<2x1xf32>
    %114 = vector.broadcast %113 : vector<2x1xf32> to vector<2x128xf32>
    %115 = arith.subf %111, %114 : vector<2x128xf32>
    %116 = math.exp %115 : vector<2x128xf32>
    %cst_13 = arith.constant dense<0.000000e+00> : vector<2xf32>
    %117 = vector.multi_reduction <add>, %116, %cst_13 [1] : vector<2x128xf32> to vector<2xf32>
    %118 = vector.shape_cast %117 : vector<2xf32> to vector<2x1xf32>
    %119 = tpu.reciprocal %118 : vector<2x1xf32> -> vector<2x1xf32>
    %120 = vector.broadcast %119 : vector<2x1xf32> to vector<2x128xf32>
    %121 = arith.mulf %116, %120 : vector<2x128xf32>
    %122 = vector.shape_cast %121 : vector<2x128xf32> to vector<2x1x128xf32>
    %123 = vector.broadcast %122 : vector<2x1x128xf32> to vector<2x16x128xf32>
    %124 = arith.mulf %123, %81 : vector<2x16x128xf32>
    %cst_14 = arith.constant dense<0.000000e+00> : vector<2x16xf32>
    %125 = vector.multi_reduction <add>, %124, %cst_14 [2] : vector<2x16x128xf32> to vector<2x16xf32>
    %126 = arith.mulf %125, %125 : vector<2x16xf32>
    %cst_15 = arith.constant dense<0.000000e+00> : vector<2xf32>
    %127 = vector.multi_reduction <add>, %126, %cst_15 [1] : vector<2x16xf32> to vector<2xf32>
    %128 = vector.shape_cast %127 : vector<2xf32> to vector<2x1xf32>
    %129 = math.sqrt %128 : vector<2x1xf32>
    %cst_16 = arith.constant 1.000000e+00 : f32
    %130 = vector.broadcast %cst_16 : f32 to vector<2x1xf32>
    %131 = arith.addf %130, %128 : vector<2x1xf32>
    %132 = tpu.reciprocal %131 : vector<2x1xf32> -> vector<2x1xf32>
    %133 = arith.mulf %129, %132 : vector<2x1xf32>
    %134 = vector.broadcast %133 : vector<2x1xf32> to vector<2x16xf32>
    %135 = arith.mulf %125, %134 : vector<2x16xf32>
    %136 = vector.shape_cast %135 : vector<2x16xf32> to vector<2x16x1xf32>
    %137 = vector.broadcast %136 : vector<2x16x1xf32> to vector<2x16x128xf32>
    %138 = arith.mulf %81, %137 : vector<2x16x128xf32>
    %cst_17 = arith.constant dense<0.000000e+00> : vector<2x128xf32>
    %139 = vector.multi_reduction <add>, %138, %cst_17 [1] : vector<2x16x128xf32> to vector<2x128xf32>
    %140 = arith.addf %111, %139 : vector<2x128xf32>
    %cst_18 = arith.constant dense<0xFF800000> : vector<2xf32>
    %141 = vector.multi_reduction <maximumf>, %140, %cst_18 [1] : vector<2x128xf32> to vector<2xf32>
    %142 = vector.shape_cast %141 : vector<2xf32> to vector<2x1xf32>
    %143 = vector.broadcast %142 : vector<2x1xf32> to vector<2x128xf32>
    %144 = arith.subf %140, %143 : vector<2x128xf32>
    %145 = math.exp %144 : vector<2x128xf32>
    %cst_19 = arith.constant dense<0.000000e+00> : vector<2xf32>
    %146 = vector.multi_reduction <add>, %145, %cst_19 [1] : vector<2x128xf32> to vector<2xf32>
    %147 = vector.shape_cast %146 : vector<2xf32> to vector<2x1xf32>
    %148 = tpu.reciprocal %147 : vector<2x1xf32> -> vector<2x1xf32>
    %149 = vector.broadcast %148 : vector<2x1xf32> to vector<2x128xf32>
    %150 = arith.mulf %145, %149 : vector<2x128xf32>
    %151 = vector.shape_cast %150 : vector<2x128xf32> to vector<2x1x128xf32>
    %152 = vector.broadcast %151 : vector<2x1x128xf32> to vector<2x16x128xf32>
    %153 = arith.mulf %152, %81 : vector<2x16x128xf32>
    %cst_20 = arith.constant dense<0.000000e+00> : vector<2x16xf32>
    %154 = vector.multi_reduction <add>, %153, %cst_20 [2] : vector<2x16x128xf32> to vector<2x16xf32>
    %155 = arith.mulf %154, %154 : vector<2x16xf32>
    %cst_21 = arith.constant dense<0.000000e+00> : vector<2xf32>
    %156 = vector.multi_reduction <add>, %155, %cst_21 [1] : vector<2x16xf32> to vector<2xf32>
    %157 = vector.shape_cast %156 : vector<2xf32> to vector<2x1xf32>
    %158 = math.sqrt %157 : vector<2x1xf32>
    %cst_22 = arith.constant 1.000000e+00 : f32
    %159 = vector.broadcast %cst_22 : f32 to vector<2x1xf32>
    %160 = arith.addf %159, %157 : vector<2x1xf32>
    %161 = tpu.reciprocal %160 : vector<2x1xf32> -> vector<2x1xf32>
    %162 = arith.mulf %158, %161 : vector<2x1xf32>
    %163 = vector.broadcast %162 : vector<2x1xf32> to vector<2x16xf32>
    %164 = arith.mulf %154, %163 : vector<2x16xf32>
    %c0_23 = arith.constant 0 : index
    %c0_24 = arith.constant 0 : index
    %c0_25 = arith.constant 0 : index
    %165 = vector.load %arg4[%c0_23, %c0_24, %c0_25] : memref<1x2x16xf32, #tpu.memory_space<vmem>>, vector<1x2x16xf32>
    %166 = vector.shape_cast %165 : vector<1x2x16xf32> to vector<2x16xf32>
    %167 = vector.shape_cast %164 : vector<2x16xf32> to vector<1x2x16xf32>
    tpu.vector_store %arg4[%c0_23, %c0_24, %c0_25], %167 {strides = array<i32>} : memref<1x2x16xf32, #tpu.memory_space<vmem>>, vector<1x2x16xf32>,
    return
  }
  func.func @transform_0(%arg0: i32, %arg1: i32) -> (i32, i32, i32) {
    %c0_i32 = arith.constant 0 : i32
    %c0_i32_0 = arith.constant 0 : i32
    %c0_i32_1 = arith.constant 0 : i32
    return %arg1, %c0_i32, %c0_i32_0 : i32, i32, i32
  }
  func.func @transform_1(%arg0: i32, %arg1: i32) -> (i32, i32, i32, i32) {
    %c0_i32 = arith.constant 0 : i32
    %c0_i32_0 = arith.constant 0 : i32
    %c0_i32_1 = arith.constant 0 : i32
    %c0_i32_2 = arith.constant 0 : i32
    return %arg0, %c0_i32, %c0_i32_0, %c0_i32_1 : i32, i32, i32, i32
  }
  func.func @transform_2(%arg0: i32, %arg1: i32) -> (i32, i32, i32) {
    %c0_i32 = arith.constant 0 : i32
    %c0_i32_0 = arith.constant 0 : i32
    return %arg0, %arg1, %c0_i32 : i32, i32, i32
  }
}

</mosaic_0001>

<llo_original>
// kernel: tpu_custom_call.1
$region0: #{tpu_custom_call.1}
  #allocation0 [shape = 'u32[]', space=smem, size = 0x4, offset = 0x4, fixed_abs, tag = 'smem constant byte address 0x4 - core index']
  #allocation1 [shape = 'u32[144,128]{1,0:T(1,128)}', space=vmem, size = 0x12000, scoped, tag = 'internal scratch']
  %s0 = inlined_call_operand.hbm [shape: f32[2,8,128], index: 0, kind: input, shape index: {}]
  %s1 = inlined_call_operand.hbm [shape: f32[4,16,8,128], index: 1, kind: input, shape index: {}]
  %s2 = inlined_call_operand.hbm [shape: f32[4,2,16], index: 2, kind: output, shape index: {}]
  %s3 = sld [smem:[#allocation0]]
  $region49: #{tpu_custom_call.1} parent=0
    _
  %s5 = ssub.s32 1, %s3
  %s6 = scalar_select 0, %s5, %s3
  $region1: #{tpu_custom_call.1} parent=0
    #allocation2 [shape = 'u8[8192]{0}', space=vmem, size = 0x2000, scoped, tag = 'input window, operand 0, single buffered']
    #allocation3 [shape = 's32[2]{0}', space=sflag, size = 0x8, scoped, tag = 'scoped memory for tpu_custom_call.1']
    #allocation4 [shape = 's32[2]{0}', space=sflag, size = 0x8, scoped, tag = 'scoped memory for tpu_custom_call.1']
    #allocation5 [shape = 'u8[131072]{0}', space=vmem, size = 0x20000, scoped, tag = 'input window, operand 1']
    #allocation6 [shape = 's32[2]{0}', space=sflag, size = 0x8, scoped, tag = 'scoped memory for tpu_custom_call.1']
    #allocation7 [shape = 'u8[2048]{0}', space=vmem, size = 0x800, scoped, tag = 'output window, operand 0']
    %7 = vsyncpa [#allocation3], 0
    %8 = vsyncpa [#allocation6], 0
    %s9 = scalar_lea.sflag [#allocation6], 1
    %10 = vsyncpa %s9, 0
    %11 = vsyncpa [#allocation4], 0
    %s12 = scalar_lea.sflag [#allocation4], 1
    %13 = vsyncpa %s12, 0
    loop: start=0, step=1, limit=6
    $region2: #{tpu_custom_call.1} parent=1 // loop_pre_header
      _
    $region3: #{tpu_custom_call.1} parent=1 // loop_header
      %s15 = sphi 0, %s19
      %p16 = scmp.ge.s32.totalorder %s15, 6
      %s22 = sphi 0, %s34
      %s23 = sphi 0, %s30
      %s24 = sphi 0, %s22
      %s25 = sphi 0, %s23
      %s26 = sphi 0, %s24
      %s27 = sphi 0, %s25
      %s37 = sphi 0, %s39
      %s40 = sphi 0, %s37
      %s41 = sphi 0, %s40
      %s57 = sphi 0, %s41
      %s63 = sphi 0, %s65
      %s66 = sphi 0, %s63
      %s67 = sphi 0, %s66
      %s83 = sphi 0, %s67
      %s91 = sphi 0, %s93
      %s94 = sphi 0, %s91
      %s95 = sphi 0, %s94
      %s111 = sphi 0, %s95
    $region4: #{tpu_custom_call.1} parent=1 // loop_header_branch
      %18 = sbr.rel (%p16) target = $region8
    $region5: #{tpu_custom_call.1} parent=1 // loop_body
      %s20 = ssub.s32 %s15, 1
      %s21 = ssub.s32 %s15, 2
      %s28 = sadd.s32 1, %s23
      %p29 = scmp.ge.s32.totalorder %s28, 1
      %s30 = scalar_select %p29, 0, %s28
      %s31 = sadd.s32 1, %s22
      %s32 = scalar_select %p29, %s31, %s22
      %p33 = scmp.ge.s32.totalorder %s32, 4
      %s34 = scalar_select %p33, 0, %s32
      %s35 = ssub.s32 %s23, %s30
      %p36 = scmp.eq.s32.totalorder %s35, 0
      %s38 = sadd.s32 %s37, 1
      %s39 = scalar_select %p36, %s37, %s38
      %p42 = pneg %p36
      %p43 = scmp.eq.s32.totalorder %s15, 3
      %p44 = por %p42, %p43
      %p45 = scmp.ne.s32.totalorder %s37, %s40
      %p46 = scmp.eq.s32.totalorder %s15, 0
      %p47 = por %p45, %p46
      %p48 = scmp.ne.s32.totalorder %s37, %s40
      %p49 = scmp.eq.s32.totalorder %s20, 3
      %p50 = por %p48, %p49
      %p51 = scmp.ne.s32.totalorder %s40, %s41
      %p52 = scmp.eq.s32.totalorder %s20, 0
      %p53 = por %p51, %p52
      %p54 = scmp.ne.s32.totalorder %s40, %s41
      %p55 = scmp.eq.s32.totalorder %s21, 3
      %p56 = por %p54, %p55
      %p58 = scmp.ne.s32.totalorder %s41, %s57
      %p59 = scmp.eq.s32.totalorder %s21, 0
      %p60 = por %p58, %p59
      %s61 = ssub.s32 %s22, %s34
      %p62 = scmp.eq.s32.totalorder %s61, 0
      %s64 = sadd.s32 %s63, 1
      %s65 = scalar_select %p62, %s63, %s64
      %p68 = pneg %p62
      %p69 = scmp.eq.s32.totalorder %s15, 3
      %p70 = por %p68, %p69
      %p71 = scmp.ne.s32.totalorder %s63, %s66
      %p72 = scmp.eq.s32.totalorder %s15, 0
      %p73 = por %p71, %p72
      %p74 = scmp.ne.s32.totalorder %s63, %s66
      %p75 = scmp.eq.s32.totalorder %s20, 3
      %p76 = por %p74, %p75
      %p77 = scmp.ne.s32.totalorder %s66, %s67
      %p78 = scmp.eq.s32.totalorder %s20, 0
      %p79 = por %p77, %p78
      %p80 = scmp.ne.s32.totalorder %s66, %s67
      %p81 = scmp.eq.s32.totalorder %s21, 3
      %p82 = por %p80, %p81
      %p84 = scmp.ne.s32.totalorder %s67, %s83
      %p85 = scmp.eq.s32.totalorder %s21, 0
      %p86 = por %p84, %p85
      %s87 = ssub.s32 %s22, %s34
      %s88 = ssub.s32 %s23, %s30
      %s89 = sor.u32 %s87, %s88
      %p90 = scmp.eq.s32.totalorder %s89, 0
      %s92 = sadd.s32 %s91, 1
      %s93 = scalar_select %p90, %s91, %s92
      %p96 = pneg %p90
      %p97 = scmp.eq.s32.totalorder %s15, 3
      %p98 = por %p96, %p97
      %p99 = scmp.ne.s32.totalorder %s91, %s94
      %p100 = scmp.eq.s32.totalorder %s15, 0
      %p101 = por %p99, %p100
      %p102 = scmp.ne.s32.totalorder %s91, %s94
      %p103 = scmp.eq.s32.totalorder %s20, 3
      %p104 = por %p102, %p103
      %p105 = scmp.ne.s32.totalorder %s94, %s95
      %p106 = scmp.eq.s32.totalorder %s20, 0
      %p107 = por %p105, %p106
      %p108 = scmp.ne.s32.totalorder %s94, %s95
      %p109 = scmp.eq.s32.totalorder %s21, 3
      %p110 = por %p108, %p109
      %p112 = scmp.ne.s32.totalorder %s95, %s111
      %p113 = scmp.eq.s32.totalorder %s21, 0
      %p114 = por %p112, %p113
      %p115 = scmp.le.s32.totalorder 1, %s15
      %p116 = scmp.lt.s32.totalorder %s15, 5
      %p117 = pnand %p115, %p116
      %p118 = pneg %p117
      // Predicated region
      $region9: #{tpu_custom_call.1} parent=5 // pred_check
        _
      $region10: #{tpu_custom_call.1} parent=5 // pred_check_branch
        %120 = sbr.rel (%p117) target = $region12
      $region11: #{tpu_custom_call.1} parent=5 // pred_region
        %s121 = ssub.s32 %s15, 1
        // Predicated region
        $region13: #{tpu_custom_call.1} parent=11 // pred_check
          %p122 = pneg %p53
        $region14: #{tpu_custom_call.1} parent=11 // pred_check_branch
          %124 = sbr.rel (%p122) target = $region16
        $region15: #{tpu_custom_call.1} parent=11 // pred_region
          %s125 = smul.u32 2, %s25
          %s127 = ssub.s32 256, 256
          %128 = vsyncadd [#allocation3], %s127
          %s129 = smul.addr %s125, 128
          %s130 = scalar_lea.hbm %s0, %s129
          %s131 = sshll.u32 [#allocation2], 4
          %s132 = int_to_ptr.vmem [resolvable:$true] %s131
          %137 = dma.hbm_to_vmem [thread:$0]  %s130, 256, %s132, [#allocation3], 128, 128, 8
        $region16: #{tpu_custom_call.1} parent=11 // pred_fallthru
          _
      $region12: #{tpu_custom_call.1} parent=5 // pred_fallthru
        _
      %p138 = scmp.lt.s32.totalorder %s15, 4
      // Predicated region
      $region17: #{tpu_custom_call.1} parent=5 // pred_check
        %p139 = pneg %p138
      $region18: #{tpu_custom_call.1} parent=5 // pred_check_branch
        %141 = sbr.rel (%p139) target = $region20
      $region19: #{tpu_custom_call.1} parent=5 // pred_region
        // Predicated region
        $region21: #{tpu_custom_call.1} parent=19 // pred_check
          %p142 = pneg %p73
        $region22: #{tpu_custom_call.1} parent=19 // pred_check_branch
          %144 = sbr.rel (%p142) target = $region24
        $region23: #{tpu_custom_call.1} parent=19 // pred_region
          %s145 = sand.u32 %s63, 1
          %s146 = scalar_lea.sflag [#allocation6], %s145
          %s147 = sand.u32 %s63, 1
          %s148 = smul.addr %s147, 128
          %s149 = scalar_lea.vmem [#allocation5], %s148
          %s151 = ssub.s32 2048, 2048
          %152 = vsyncadd %s146, %s151
          %s153 = smul.addr %s22, 16
          %s154 = smul.addr %s153, 128
          %s155 = scalar_lea.hbm %s1, %s154
          %s156 = sshll.u32 %s149, 4
          %s157 = int_to_ptr.vmem [resolvable:$true] %s156
          %162 = dma.hbm_to_vmem [thread:$0]  %s155, 2048, %s157, %s146, 128, 128, 8
        $region24: #{tpu_custom_call.1} parent=19 // pred_fallthru
          _
      $region20: #{tpu_custom_call.1} parent=5 // pred_fallthru
        _
      %p163 = scmp.le.s32.totalorder 1, %s15
      %p164 = scmp.lt.s32.totalorder %s15, 5
      %p165 = pnand %p163, %p164
      %p166 = pneg %p165
      // Predicated region
      $region25: #{tpu_custom_call.1} parent=5 // pred_check
        _
      $region26: #{tpu_custom_call.1} parent=5 // pred_check_branch
        %168 = sbr.rel (%p165) target = $region28
      $region27: #{tpu_custom_call.1} parent=5 // pred_region
        %s169 = ssub.s32 %s15, 1
        // Predicated region
        $region29: #{tpu_custom_call.1} parent=27 // pred_check
          %p170 = pneg %p53
        $region30: #{tpu_custom_call.1} parent=27 // pred_check_branch
          %172 = sbr.rel (%p170) target = $region32
        $region31: #{tpu_custom_call.1} parent=27 // pred_region
          %173 = dma.done [#allocation3], 256
        $region32: #{tpu_custom_call.1} parent=27 // pred_fallthru
          _
        %s174 = sand.u32 %s66, 1
        %s175 = scalar_lea.sflag [#allocation6], %s174
        %s176 = sand.u32 %s66, 1
        %s177 = smul.addr %s176, 128
        %s178 = scalar_lea.vmem [#allocation5], %s177
        // Predicated region
        $region33: #{tpu_custom_call.1} parent=27 // pred_check
          %p179 = pneg %p79
        $region34: #{tpu_custom_call.1} parent=27 // pred_check_branch
          %181 = sbr.rel (%p179) target = $region36
        $region35: #{tpu_custom_call.1} parent=27 // pred_region
          %182 = dma.done %s175, 2048
        $region36: #{tpu_custom_call.1} parent=27 // pred_fallthru
          _
        %p183 = pneg %p53
        %p184 = pneg %p50
        %s185 = sand.u32 %s66, 1
        %s186 = scalar_lea.sflag [#allocation6], %s185
        %s187 = sand.u32 %s66, 1
        %s188 = smul.addr %s187, 128
        %s189 = scalar_lea.vmem [#allocation5], %s188
        %p190 = pneg %p79
        %p191 = pneg %p76
        %p192 = pneg %p107
        %p193 = pneg %p104
        %s194 = sand.u32 %s94, 1
        %s195 = scalar_lea.sflag [#allocation4], %s194
        %s196 = sand.u32 %s94, 1
        %s197 = smul.addr %s196, 2
        %s198 = scalar_lea.vmem [#allocation7], %s197
        %s199 = smul.u32 2, %s25
        %v200 = vld [vmem:[#allocation2] sm:$0xff]
        %v201 = vld [vmem:[#allocation2 + $0x8] sm:$0xff]
        %v202 = vld [vmem:[%s178] sm:$0xff]
        %v203 = vld [vmem:[%s178 + $0x8] sm:$0xff]
        %v204 = vld [vmem:[%s178 + $0x10] sm:$0xff]
        %v205 = vld [vmem:[%s178 + $0x18] sm:$0xff]
        %v206 = vld [vmem:[%s178 + $0x20] sm:$0xff]
        %v207 = vld [vmem:[%s178 + $0x28] sm:$0xff]
        %v208 = vld [vmem:[%s178 + $0x30] sm:$0xff]
        %v209 = vld [vmem:[%s178 + $0x38] sm:$0xff]
        %v210 = vld [vmem:[%s178 + $0x40] sm:$0xff]
        %v211 = vld [vmem:[%s178 + $0x48] sm:$0xff]
        %v212 = vld [vmem:[%s178 + $0x50] sm:$0xff]
        %v213 = vld [vmem:[%s178 + $0x58] sm:$0xff]
        %v214 = vld [vmem:[%s178 + $0x60] sm:$0xff]
        %v215 = vld [vmem:[%s178 + $0x68] sm:$0xff]
        %v216 = vld [vmem:[%s178 + $0x70] sm:$0xff]
        %v217 = vld [vmem:[%s178 + $0x78] sm:$0xff]
        %v218 = vlaneseq
        %v219 = vshrl.u32 %v218, 7
        %v220 = vsub.s32 0, %v219
        %v221 = vrot.slane %v200, %v220
        %v222 = vlaneseq
        %v223 = vshrl.u32 %v222, 7
        %v224 = vsub.s32 0, %v223
        %v225 = vrot.slane %v201, %v224
        %v242 = vrot.slane %v203, 7
        %vm243 = vcmask 1041409
        %v244 = vsel %vm243, %v242, %v202
        %v245 = vrot.slane %v204, 6
        %vm246 = vcmask 1042434
        %v247 = vsel %vm246, %v245, %v244
        %v248 = vrot.slane %v205, 5
        %vm249 = vcmask 1043459
        %v250 = vsel %vm249, %v248, %v247
        %v251 = vrot.slane %v206, 4
        %vm252 = vcmask 1044484
        %v253 = vsel %vm252, %v251, %v250
        %v254 = vrot.slane %v207, 3
        %vm255 = vcmask 1045509
        %v256 = vsel %vm255, %v254, %v253
        %v257 = vrot.slane %v208, 2
        %vm258 = vcmask 1046534
        %v259 = vsel %vm258, %v257, %v256
        %v260 = vrot.slane %v209, 1
        %vm261 = vcmask 1047559
        %v262 = vsel %vm261, %v260, %v259
        %v263 = vrot.slane %v211, 7
        %v264 = vsel %vm243, %v263, %v210
        %v265 = vrot.slane %v212, 6
        %v266 = vsel %vm246, %v265, %v264
        %v267 = vrot.slane %v213, 5
        %v268 = vsel %vm249, %v267, %v266
        %v269 = vrot.slane %v214, 4
        %v270 = vsel %vm252, %v269, %v268
        %v271 = vrot.slane %v215, 3
        %v272 = vsel %vm255, %v271, %v270
        %v273 = vrot.slane %v216, 2
        %v274 = vsel %vm258, %v273, %v272
        %v275 = vrot.slane %v217, 1
        %v276 = vsel %vm261, %v275, %v274
        %v279 = vmul.f32 %v221, %v262
        %v280 = vmul.f32 %v221, %v276
        %v281 = vmul.f32 %v225, %v262
        %v282 = vmul.f32 %v225, %v276
        %v283 = vlaneseq
        %v284 = vshrl.u32 %v283, 7
        %v285 = vsub.s32 1, %v284
        %v286 = vrot.slane %v200, %v285
        %v287 = vlaneseq
        %v288 = vshrl.u32 %v287, 7
        %v289 = vsub.s32 1, %v288
        %v290 = vrot.slane %v201, %v289
        %v291 = vrot.slane %v202, 1
        %v292 = vsel %vm243, %v203, %v291
        %v293 = vrot.slane %v204, 7
        %v294 = vsel %vm246, %v293, %v292
        %v295 = vrot.slane %v205, 6
        %v296 = vsel %vm249, %v295, %v294
        %v297 = vrot.slane %v206, 5
        %v298 = vsel %vm252, %v297, %v296
        %v299 = vrot.slane %v207, 4
        %v300 = vsel %vm255, %v299, %v298
        %v301 = vrot.slane %v208, 3
        %v302 = vsel %vm258, %v301, %v300
        %v303 = vrot.slane %v209, 2
        %v304 = vsel %vm261, %v303, %v302
        %v305 = vrot.slane %v210, 1
        %v306 = vsel %vm243, %v211, %v305
        %v307 = vrot.slane %v212, 7
        %v308 = vsel %vm246, %v307, %v306
        %v309 = vrot.slane %v213, 6
        %v310 = vsel %vm249, %v309, %v308
        %v311 = vrot.slane %v214, 5
        %v312 = vsel %vm252, %v311, %v310
        %v313 = vrot.slane %v215, 4
        %v314 = vsel %vm255, %v313, %v312
        %v315 = vrot.slane %v216, 3
        %v316 = vsel %vm258, %v315, %v314
        %v317 = vrot.slane %v217, 2
        %v318 = vsel %vm261, %v317, %v316
        %v321 = vmul.f32 %v286, %v304
        %v322 = vmul.f32 %v286, %v318
        %v323 = vmul.f32 %v290, %v304
        %v324 = vmul.f32 %v290, %v318
        %v325 = vadd.f32 %v279, %v321
        %v326 = vadd.f32 %v280, %v322
        %v327 = vadd.f32 %v281, %v323
        %v328 = vadd.f32 %v282, %v324
        %v329 = vlaneseq
        %v330 = vshrl.u32 %v329, 7
        %v331 = vsub.s32 2, %v330
        %v332 = vrot.slane %v200, %v331
        %v333 = vlaneseq
        %v334 = vshrl.u32 %v333, 7
        %v335 = vsub.s32 2, %v334
        %v336 = vrot.slane %v201, %v335
        %v337 = vrot.slane %v202, 2
        %v338 = vrot.slane %v203, 1
        %v339 = vsel %vm243, %v338, %v337
        %v340 = vsel %vm246, %v204, %v339
        %v341 = vrot.slane %v205, 7
        %v342 = vsel %vm249, %v341, %v340
        %v343 = vrot.slane %v206, 6
        %v344 = vsel %vm252, %v343, %v342
        %v345 = vrot.slane %v207, 5
        %v346 = vsel %vm255, %v345, %v344
        %v347 = vrot.slane %v208, 4
        %v348 = vsel %vm258, %v347, %v346
        %v349 = vrot.slane %v209, 3
        %v350 = vsel %vm261, %v349, %v348
        %v351 = vrot.slane %v210, 2
        %v352 = vrot.slane %v211, 1
        %v353 = vsel %vm243, %v352, %v351
        %v354 = vsel %vm246, %v212, %v353
        %v355 = vrot.slane %v213, 7
        %v356 = vsel %vm249, %v355, %v354
        %v357 = vrot.slane %v214, 6
        %v358 = vsel %vm252, %v357, %v356
        %v359 = vrot.slane %v215, 5
        %v360 = vsel %vm255, %v359, %v358
        %v361 = vrot.slane %v216, 4
        %v362 = vsel %vm258, %v361, %v360
        %v363 = vrot.slane %v217, 3
        %v364 = vsel %vm261, %v363, %v362
        %v367 = vmul.f32 %v332, %v350
        %v368 = vmul.f32 %v332, %v364
        %v369 = vmul.f32 %v336, %v350
        %v370 = vmul.f32 %v336, %v364
        %v371 = vadd.f32 %v325, %v367
        %v372 = vadd.f32 %v326, %v368
        %v373 = vadd.f32 %v327, %v369
        %v374 = vadd.f32 %v328, %v370
        %v375 = vlaneseq
        %v376 = vshrl.u32 %v375, 7
        %v377 = vsub.s32 3, %v376
        %v378 = vrot.slane %v200, %v377
        %v379 = vlaneseq
        %v380 = vshrl.u32 %v379, 7
        %v381 = vsub.s32 3, %v380
        %v382 = vrot.slane %v201, %v381
        %v383 = vrot.slane %v202, 3
        %v384 = vrot.slane %v203, 2
        %v385 = vsel %vm243, %v384, %v383
        %v386 = vrot.slane %v204, 1
        %v387 = vsel %vm246, %v386, %v385
        %v388 = vsel %vm249, %v205, %v387
        %v389 = vrot.slane %v206, 7
        %v390 = vsel %vm252, %v389, %v388
        %v391 = vrot.slane %v207, 6
        %v392 = vsel %vm255, %v391, %v390
        %v393 = vrot.slane %v208, 5
        %v394 = vsel %vm258, %v393, %v392
        %v395 = vrot.slane %v209, 4
        %v396 = vsel %vm261, %v395, %v394
        %v397 = vrot.slane %v210, 3
        %v398 = vrot.slane %v211, 2
        %v399 = vsel %vm243, %v398, %v397
        %v400 = vrot.slane %v212, 1
        %v401 = vsel %vm246, %v400, %v399
        %v402 = vsel %vm249, %v213, %v401
        %v403 = vrot.slane %v214, 7
        %v404 = vsel %vm252, %v403, %v402
        %v405 = vrot.slane %v215, 6
        %v406 = vsel %vm255, %v405, %v404
        %v407 = vrot.slane %v216, 5
        %v408 = vsel %vm258, %v407, %v406
        %v409 = vrot.slane %v217, 4
        %v410 = vsel %vm261, %v409, %v408
        %v413 = vmul.f32 %v378, %v396
        %v414 = vmul.f32 %v378, %v410
        %v415 = vmul.f32 %v382, %v396
        %v416 = vmul.f32 %v382, %v410
        %v417 = vadd.f32 %v371, %v413
        %v418 = vadd.f32 %v372, %v414
        %v419 = vadd.f32 %v373, %v415
        %v420 = vadd.f32 %v374, %v416
        %v421 = vlaneseq
        %v422 = vshrl.u32 %v421, 7
        %v423 = vsub.s32 4, %v422
        %v424 = vrot.slane %v200, %v423
        %v425 = vlaneseq
        %v426 = vshrl.u32 %v425, 7
        %v427 = vsub.s32 4, %v426
        %v428 = vrot.slane %v201, %v427
        %v429 = vrot.slane %v202, 4
        %v430 = vrot.slane %v203, 3
        %v431 = vsel %vm243, %v430, %v429
        %v432 = vrot.slane %v204, 2
        %v433 = vsel %vm246, %v432, %v431
        %v434 = vrot.slane %v205, 1
        %v435 = vsel %vm249, %v434, %v433
        %v436 = vsel %vm252, %v206, %v435
        %v437 = vrot.slane %v207, 7
        %v438 = vsel %vm255, %v437, %v436
        %v439 = vrot.slane %v208, 6
        %v440 = vsel %vm258, %v439, %v438
        %v441 = vrot.slane %v209, 5
        %v442 = vsel %vm261, %v441, %v440
        %v443 = vrot.slane %v210, 4
        %v444 = vrot.slane %v211, 3
        %v445 = vsel %vm243, %v444, %v443
        %v446 = vrot.slane %v212, 2
        %v447 = vsel %vm246, %v446, %v445
        %v448 = vrot.slane %v213, 1
        %v449 = vsel %vm249, %v448, %v447
        %v450 = vsel %vm252, %v214, %v449
        %v451 = vrot.slane %v215, 7
        %v452 = vsel %vm255, %v451, %v450
        %v453 = vrot.slane %v216, 6
        %v454 = vsel %vm258, %v453, %v452
        %v455 = vrot.slane %v217, 5
        %v456 = vsel %vm261, %v455, %v454
        %v459 = vmul.f32 %v424, %v442
        %v460 = vmul.f32 %v424, %v456
        %v461 = vmul.f32 %v428, %v442
        %v462 = vmul.f32 %v428, %v456
        %v463 = vadd.f32 %v417, %v459
        %v464 = vadd.f32 %v418, %v460
        %v465 = vadd.f32 %v419, %v461
        %v466 = vadd.f32 %v420, %v462
        %v467 = vlaneseq
        %v468 = vshrl.u32 %v467, 7
        %v469 = vsub.s32 5, %v468
        %v470 = vrot.slane %v200, %v469
        %v471 = vlaneseq
        %v472 = vshrl.u32 %v471, 7
        %v473 = vsub.s32 5, %v472
        %v474 = vrot.slane %v201, %v473
        %v475 = vrot.slane %v202, 5
        %v476 = vrot.slane %v203, 4
        %v477 = vsel %vm243, %v476, %v475
        %v478 = vrot.slane %v204, 3
        %v479 = vsel %vm246, %v478, %v477
        %v480 = vrot.slane %v205, 2
        %v481 = vsel %vm249, %v480, %v479
        %v482 = vrot.slane %v206, 1
        %v483 = vsel %vm252, %v482, %v481
        %v484 = vsel %vm255, %v207, %v483
        %v485 = vrot.slane %v208, 7
        %v486 = vsel %vm258, %v485, %v484
        %v487 = vrot.slane %v209, 6
        %v488 = vsel %vm261, %v487, %v486
        %v489 = vrot.slane %v210, 5
        %v490 = vrot.slane %v211, 4
        %v491 = vsel %vm243, %v490, %v489
        %v492 = vrot.slane %v212, 3
        %v493 = vsel %vm246, %v492, %v491
        %v494 = vrot.slane %v213, 2
        %v495 = vsel %vm249, %v494, %v493
        %v496 = vrot.slane %v214, 1
        %v497 = vsel %vm252, %v496, %v495
        %v498 = vsel %vm255, %v215, %v497
        %v499 = vrot.slane %v216, 7
        %v500 = vsel %vm258, %v499, %v498
        %v501 = vrot.slane %v217, 6
        %v502 = vsel %vm261, %v501, %v500
        %v505 = vmul.f32 %v470, %v488
        %v506 = vmul.f32 %v470, %v502
        %v507 = vmul.f32 %v474, %v488
        %v508 = vmul.f32 %v474, %v502
        %v509 = vadd.f32 %v463, %v505
        %v510 = vadd.f32 %v464, %v506
        %v511 = vadd.f32 %v465, %v507
        %v512 = vadd.f32 %v466, %v508
        %v513 = vlaneseq
        %v514 = vshrl.u32 %v513, 7
        %v515 = vsub.s32 6, %v514
        %v516 = vrot.slane %v200, %v515
        %v517 = vlaneseq
        %v518 = vshrl.u32 %v517, 7
        %v519 = vsub.s32 6, %v518
        %v520 = vrot.slane %v201, %v519
        %v521 = vrot.slane %v202, 6
        %v522 = vrot.slane %v203, 5
        %v523 = vsel %vm243, %v522, %v521
        %v524 = vrot.slane %v204, 4
        %v525 = vsel %vm246, %v524, %v523
        %v526 = vrot.slane %v205, 3
        %v527 = vsel %vm249, %v526, %v525
        %v528 = vrot.slane %v206, 2
        %v529 = vsel %vm252, %v528, %v527
        %v530 = vrot.slane %v207, 1
        %v531 = vsel %vm255, %v530, %v529
        %v532 = vsel %vm258, %v208, %v531
        %v533 = vrot.slane %v209, 7
        %v534 = vsel %vm261, %v533, %v532
        %v535 = vrot.slane %v210, 6
        %v536 = vrot.slane %v211, 5
        %v537 = vsel %vm243, %v536, %v535
        %v538 = vrot.slane %v212, 4
        %v539 = vsel %vm246, %v538, %v537
        %v540 = vrot.slane %v213, 3
        %v541 = vsel %vm249, %v540, %v539
        %v542 = vrot.slane %v214, 2
        %v543 = vsel %vm252, %v542, %v541
        %v544 = vrot.slane %v215, 1
        %v545 = vsel %vm255, %v544, %v543
        %v546 = vsel %vm258, %v216, %v545
        %v547 = vrot.slane %v217, 7
        %v548 = vsel %vm261, %v547, %v546
        %v551 = vmul.f32 %v516, %v534
        %v552 = vmul.f32 %v516, %v548
        %v553 = vmul.f32 %v520, %v534
        %v554 = vmul.f32 %v520, %v548
        %v555 = vadd.f32 %v509, %v551
        %v556 = vadd.f32 %v510, %v552
        %v557 = vadd.f32 %v511, %v553
        %v558 = vadd.f32 %v512, %v554
        %v559 = vlaneseq
        %v560 = vshrl.u32 %v559, 7
        %v561 = vsub.s32 7, %v560
        %v562 = vrot.slane %v200, %v561
        %v563 = vlaneseq
        %v564 = vshrl.u32 %v563, 7
        %v565 = vsub.s32 7, %v564
        %v566 = vrot.slane %v201, %v565
        %v567 = vrot.slane %v202, 7
        %v568 = vrot.slane %v203, 6
        %v569 = vsel %vm243, %v568, %v567
        %v570 = vrot.slane %v204, 5
        %v571 = vsel %vm246, %v570, %v569
        %v572 = vrot.slane %v205, 4
        %v573 = vsel %vm249, %v572, %v571
        %v574 = vrot.slane %v206, 3
        %v575 = vsel %vm252, %v574, %v573
        %v576 = vrot.slane %v207, 2
        %v577 = vsel %vm255, %v576, %v575
        %v578 = vrot.slane %v208, 1
        %v579 = vsel %vm258, %v578, %v577
        %v580 = vsel %vm261, %v209, %v579
        %v581 = vrot.slane %v210, 7
        %v582 = vrot.slane %v211, 6
        %v583 = vsel %vm243, %v582, %v581
        %v584 = vrot.slane %v212, 5
        %v585 = vsel %vm246, %v584, %v583
        %v586 = vrot.slane %v213, 4
        %v587 = vsel %vm249, %v586, %v585
        %v588 = vrot.slane %v214, 3
        %v589 = vsel %vm252, %v588, %v587
        %v590 = vrot.slane %v215, 2
        %v591 = vsel %vm255, %v590, %v589
        %v592 = vrot.slane %v216, 1
        %v593 = vsel %vm258, %v592, %v591
        %v594 = vsel %vm261, %v217, %v593
        %v597 = vmul.f32 %v562, %v580
        %v598 = vmul.f32 %v562, %v594
        %v599 = vmul.f32 %v566, %v580
        %v600 = vmul.f32 %v566, %v594
        %v601 = vadd.f32 %v555, %v597
        %v602 = vadd.f32 %v556, %v598
        %v603 = vadd.f32 %v557, %v599
        %v604 = vadd.f32 %v558, %v600
        %605 = vadd.xlane.f32.xlu0 1.0
        %v606 = vpop.xlane.xlu0 %605
        %v607 = vrcp.pop %v606
        %v608 = vmul.f32 %v607, %v601
        %v609 = vmul.f32 %v607, %v602
        %v610 = vmul.f32 %v607, %v603
        %v611 = vmul.f32 %v607, %v604
        %612 = vadd.xlane.f32.xlu0 %v608
        %v613 = vpop.xlane.xlu0 %612
        %614 = vadd.xlane.f32.xlu0 %v609
        %v615 = vpop.xlane.xlu0 %614
        %616 = vadd.xlane.f32.xlu0 %v610
        %v617 = vpop.xlane.xlu0 %616
        %618 = vadd.xlane.f32.xlu0 %v611
        %v619 = vpop.xlane.xlu0 %618
        %v620 = vmul.f32 %v613, %v613
        %v621 = vmul.f32 %v615, %v615
        %v622 = vmul.f32 %v617, %v617
        %v623 = vmul.f32 %v619, %v619
        %v628 = vlaneseq
        %v629 = vand.u32 %v628, 127
        %v630 = vlaneseq
        %v631 = vshrl.u32 %v630, 7
        %v632 = vsub.s32 %v629, %v631
        %v633 = vrot.slane %v620, %v632
        %v634 = vadd.s32 %v629, 4294967288
        %v635 = vlaneseq
        %v636 = vshrl.u32 %v635, 7
        %v637 = vsub.s32 %v634, %v636
        %v638 = vrot.slane %v621, %v637
        %vm639 = vcmask 130112
        %v640 = vsel %vm639, %v638, %v633
        %v641 = vlaneseq
        %v642 = vshrl.u32 %v641, 7
        %v643 = vsub.s32 %v629, %v642
        %v644 = vrot.slane %v622, %v643
        %v645 = vlaneseq
        %v646 = vshrl.u32 %v645, 7
        %v647 = vsub.s32 %v634, %v646
        %v648 = vrot.slane %v623, %v647
        %v649 = vsel %vm639, %v648, %v644
        %v650 = vsel %vm243, %v649, %v640
        %vm652 = vcmask 123904
        %v653 = vsel %vm652, %v650, 0.0
        %654 = vadd.xlane.f32.xlu0 %v653
        %v655 = vpop.xlane.xlu0 %654
        %v656 = vrsqrt.pop %v655
        %v657 = vmul.f32 %v655, %v656
        %vm658 = vcmp.eq.f32.partialorder %v655, inf
        %v659 = vsel %vm658, %v655, %v657
        %vm660 = vcmp.eq.f32.partialorder %v655, 0.0
        %v661 = vand.u32 %v655, 2147483648
        %v662 = vsel %vm660, %v661, %v659
        %v663 = vadd.f32 %v655, 1.0
        %v664 = vrcp.pop %v663
        %v665 = vmul.f32 %v662, %v664
        %v667 = vlaneseq
        %v668 = vshrl.u32 %v667, 7
        %v669 = vsub.s32 0, %v668
        %v670 = vrot.slane %v665, %v669
        %v671 = vlaneseq
        %v672 = vshrl.u32 %v671, 7
        %v673 = vsub.s32 1, %v672
        %v674 = vrot.slane %v665, %v673
        %v677 = vmul.f32 %v613, %v670
        %v678 = vmul.f32 %v615, %v670
        %v679 = vmul.f32 %v617, %v674
        %v680 = vmul.f32 %v619, %v674
        %682 = vset.pattern.permute.xlu0 0
        %683 = vperm.xlu0 %682, %v677
        %v684 = vpop.permute.xlu0 %683
        %687 = vset.pattern.permute.xlu0 0
        %688 = vperm.xlu0 %687, %v678
        %v689 = vpop.permute.xlu0 %688
        %692 = vset.pattern.permute.xlu0 0
        %693 = vperm.xlu0 %692, %v679
        %v694 = vpop.permute.xlu0 %693
        %697 = vset.pattern.permute.xlu0 0
        %698 = vperm.xlu0 %697, %v680
        %v699 = vpop.permute.xlu0 %698
        %v701 = vmul.f32 %v601, %v684
        %v702 = vmul.f32 %v602, %v689
        %v703 = vmul.f32 %v603, %v694
        %v704 = vmul.f32 %v604, %v699
        %v705 = vadd.f32 %v701, %v702
        %v706 = vrot.slane %v705, 4
        %v707 = vadd.f32 %v705, %v706
        %v708 = vrot.slane %v707, 2
        %v709 = vadd.f32 %v707, %v708
        %v710 = vrot.slane %v709, 1
        %v711 = vadd.f32 %v709, %v710
        %v712 = vadd.f32 %v703, %v704
        %v713 = vrot.slane %v712, 4
        %v714 = vadd.f32 %v712, %v713
        %v715 = vrot.slane %v714, 2
        %v716 = vadd.f32 %v714, %v715
        %v717 = vrot.slane %v716, 1
        %v718 = vadd.f32 %v716, %v717
        %v719 = vadd.f32 %v711, 0.0
        %v720 = vadd.f32 %v718, 0.0
        %v723 = vsel %vm243, %v720, %v719
        %vm725 = vcmask 1041408
        %v726 = vsel %vm725, %v723, -inf
        %727 = vmax.xlane.f32.xlu0 %v726
        %v728 = vpop.xlane.xlu0 %727
        %v730 = vrot.slane %v728, 1
        %v733 = vsub.f32 %v719, %v728
        %v734 = vsub.f32 %v720, %v730
        %v735 = vmul.f32 %v733, 1.442695
        %v736 = vpow.pop %v735
        %v737 = vmul.f32 %v734, 1.442695
        %v738 = vpow.pop %v737
        %v741 = vrot.slane %v738, 7
        %v742 = vsel %vm243, %v741, %v736
        %v744 = vsel %vm725, %v742, 0.0
        %745 = vadd.xlane.f32.xlu0 %v744
        %v746 = vpop.xlane.xlu0 %745
        %v747 = vrcp.pop %v746
        %v749 = vrot.slane %v747, 1
        %v752 = vmul.f32 %v736, %v747
        %v753 = vmul.f32 %v738, %v749
        %v754 = vlaneseq
        %v755 = vshrl.u32 %v754, 7
        %v756 = vsub.s32 0, %v755
        %v757 = vrot.slane %v752, %v756
        %v758 = vlaneseq
        %v759 = vshrl.u32 %v758, 7
        %v760 = vsub.s32 0, %v759
        %v761 = vrot.slane %v753, %v760
        %v762 = vmul.f32 %v757, %v601
        %v763 = vmul.f32 %v757, %v602
        %v764 = vmul.f32 %v761, %v603
        %v765 = vmul.f32 %v761, %v604
        %766 = vadd.xlane.f32.xlu0 %v762
        %v767 = vpop.xlane.xlu0 %766
        %768 = vadd.xlane.f32.xlu0 %v763
        %v769 = vpop.xlane.xlu0 %768
        %770 = vadd.xlane.f32.xlu0 %v764
        %v771 = vpop.xlane.xlu0 %770
        %772 = vadd.xlane.f32.xlu0 %v765
        %v773 = vpop.xlane.xlu0 %772
        %v774 = vmul.f32 %v767, %v767
        %v775 = vmul.f32 %v769, %v769
        %v776 = vmul.f32 %v771, %v771
        %v777 = vmul.f32 %v773, %v773
        %v782 = vlaneseq
        %v783 = vshrl.u32 %v782, 7
        %v784 = vsub.s32 %v629, %v783
        %v785 = vrot.slane %v774, %v784
        %v786 = vlaneseq
        %v787 = vshrl.u32 %v786, 7
        %v788 = vsub.s32 %v634, %v787
        %v789 = vrot.slane %v775, %v788
        %v790 = vsel %vm639, %v789, %v785
        %v791 = vlaneseq
        %v792 = vshrl.u32 %v791, 7
        %v793 = vsub.s32 %v629, %v792
        %v794 = vrot.slane %v776, %v793
        %v795 = vlaneseq
        %v796 = vshrl.u32 %v795, 7
        %v797 = vsub.s32 %v634, %v796
        %v798 = vrot.slane %v777, %v797
        %v799 = vsel %vm639, %v798, %v794
        %v800 = vsel %vm243, %v799, %v790
        %v802 = vsel %vm652, %v800, 0.0
        %803 = vadd.xlane.f32.xlu0 %v802
        %v804 = vpop.xlane.xlu0 %803
        %v805 = vrsqrt.pop %v804
        %v806 = vmul.f32 %v804, %v805
        %vm807 = vcmp.eq.f32.partialorder %v804, inf
        %v808 = vsel %vm807, %v804, %v806
        %vm809 = vcmp.eq.f32.partialorder %v804, 0.0
        %v810 = vand.u32 %v804, 2147483648
        %v811 = vsel %vm809, %v810, %v808
        %v812 = vadd.f32 %v804, 1.0
        %v813 = vrcp.pop %v812
        %v814 = vmul.f32 %v811, %v813
        %v816 = vlaneseq
        %v817 = vshrl.u32 %v816, 7
        %v818 = vsub.s32 0, %v817
        %v819 = vrot.slane %v814, %v818
        %v820 = vlaneseq
        %v821 = vshrl.u32 %v820, 7
        %v822 = vsub.s32 1, %v821
        %v823 = vrot.slane %v814, %v822
        %v826 = vmul.f32 %v767, %v819
        %v827 = vmul.f32 %v769, %v819
        %v828 = vmul.f32 %v771, %v823
        %v829 = vmul.f32 %v773, %v823
        %831 = vset.pattern.permute.xlu0 0
        %832 = vperm.xlu0 %831, %v826
        %v833 = vpop.permute.xlu0 %832
        %836 = vset.pattern.permute.xlu0 0
        %837 = vperm.xlu0 %836, %v827
        %v838 = vpop.permute.xlu0 %837
        %841 = vset.pattern.permute.xlu0 0
        %842 = vperm.xlu0 %841, %v828
        %v843 = vpop.permute.xlu0 %842
        %846 = vset.pattern.permute.xlu0 0
        %847 = vperm.xlu0 %846, %v829
        %v848 = vpop.permute.xlu0 %847
        %v850 = vmul.f32 %v601, %v833
        %v851 = vmul.f32 %v602, %v838
        %v852 = vmul.f32 %v603, %v843
        %v853 = vmul.f32 %v604, %v848
        %v854 = vadd.f32 %v850, %v851
        %v855 = vrot.slane %v854, 4
        %v856 = vadd.f32 %v854, %v855
        %v857 = vrot.slane %v856, 2
        %v858 = vadd.f32 %v856, %v857
        %v859 = vrot.slane %v858, 1
        %v860 = vadd.f32 %v858, %v859
        %v861 = vadd.f32 %v852, %v853
        %v862 = vrot.slane %v861, 4
        %v863 = vadd.f32 %v861, %v862
        %v864 = vrot.slane %v863, 2
        %v865 = vadd.f32 %v863, %v864
        %v866 = vrot.slane %v865, 1
        %v867 = vadd.f32 %v865, %v866
        %v868 = vadd.f32 %v719, %v860
        %v869 = vadd.f32 %v720, %v867
        %v872 = vsel %vm243, %v869, %v868
        %v874 = vsel %vm725, %v872, -inf
        %875 = vmax.xlane.f32.xlu0 %v874
        %v876 = vpop.xlane.xlu0 %875
        %v878 = vrot.slane %v876, 1
        %v881 = vsub.f32 %v868, %v876
        %v882 = vsub.f32 %v869, %v878
        %v883 = vmul.f32 %v881, 1.442695
        %v884 = vpow.pop %v883
        %v885 = vmul.f32 %v882, 1.442695
        %v886 = vpow.pop %v885
        %v889 = vrot.slane %v886, 7
        %v890 = vsel %vm243, %v889, %v884
        %v892 = vsel %vm725, %v890, 0.0
        %893 = vadd.xlane.f32.xlu0 %v892
        %v894 = vpop.xlane.xlu0 %893
        %v895 = vrcp.pop %v894
        %v897 = vrot.slane %v895, 1
        %v900 = vmul.f32 %v884, %v895
        %v901 = vmul.f32 %v886, %v897
        %v902 = vlaneseq
        %v903 = vshrl.u32 %v902, 7
        %v904 = vsub.s32 0, %v903
        %v905 = vrot.slane %v900, %v904
        %v906 = vlaneseq
        %v907 = vshrl.u32 %v906, 7
        %v908 = vsub.s32 0, %v907
        %v909 = vrot.slane %v901, %v908
        %v910 = vmul.f32 %v905, %v601
        %v911 = vmul.f32 %v905, %v602
        %v912 = vmul.f32 %v909, %v603
        %v913 = vmul.f32 %v909, %v604
        %914 = vadd.xlane.f32.xlu0 %v910
        %v915 = vpop.xlane.xlu0 %914
        %916 = vadd.xlane.f32.xlu0 %v911
        %v917 = vpop.xlane.xlu0 %916
        %918 = vadd.xlane.f32.xlu0 %v912
        %v919 = vpop.xlane.xlu0 %918
        %920 = vadd.xlane.f32.xlu0 %v913
        %v921 = vpop.xlane.xlu0 %920
        %v922 = vmul.f32 %v915, %v915
        %v923 = vmul.f32 %v917, %v917
        %v924 = vmul.f32 %v919, %v919
        %v925 = vmul.f32 %v921, %v921
        %v930 = vlaneseq
        %v931 = vshrl.u32 %v930, 7
        %v932 = vsub.s32 %v629, %v931
        %v933 = vrot.slane %v922, %v932
        %v934 = vlaneseq
        %v935 = vshrl.u32 %v934, 7
        %v936 = vsub.s32 %v634, %v935
        %v937 = vrot.slane %v923, %v936
        %v938 = vsel %vm639, %v937, %v933
        %v939 = vlaneseq
        %v940 = vshrl.u32 %v939, 7
        %v941 = vsub.s32 %v629, %v940
        %v942 = vrot.slane %v924, %v941
        %v943 = vlaneseq
        %v944 = vshrl.u32 %v943, 7
        %v945 = vsub.s32 %v634, %v944
        %v946 = vrot.slane %v925, %v945
        %v947 = vsel %vm639, %v946, %v942
        %v948 = vsel %vm243, %v947, %v938
        %v950 = vsel %vm652, %v948, 0.0
        %951 = vadd.xlane.f32.xlu0 %v950
        %v952 = vpop.xlane.xlu0 %951
        %v953 = vrsqrt.pop %v952
        %v954 = vmul.f32 %v952, %v953
        %vm955 = vcmp.eq.f32.partialorder %v952, inf
        %v956 = vsel %vm955, %v952, %v954
        %vm957 = vcmp.eq.f32.partialorder %v952, 0.0
        %v958 = vand.u32 %v952, 2147483648
        %v959 = vsel %vm957, %v958, %v956
        %v960 = vadd.f32 %v952, 1.0
        %v961 = vrcp.pop %v960
        %v962 = vmul.f32 %v959, %v961
        %v964 = vlaneseq
        %v965 = vshrl.u32 %v964, 7
        %v966 = vsub.s32 0, %v965
        %v967 = vrot.slane %v962, %v966
        %v968 = vlaneseq
        %v969 = vshrl.u32 %v968, 7
        %v970 = vsub.s32 1, %v969
        %v971 = vrot.slane %v962, %v970
        %v974 = vmul.f32 %v915, %v967
        %v975 = vmul.f32 %v917, %v967
        %v976 = vmul.f32 %v919, %v971
        %v977 = vmul.f32 %v921, %v971
        %982 = vset.pattern.permute.xlu0 0
        %983 = vperm.xlu0 %982, %v974
        %v984 = vpop.permute.xlu0 %983
        %985 = vset.pattern.permute.xlu0 0
        %986 = vperm.xlu0 %985, %v975
        %v987 = vpop.permute.xlu0 %986
        %988 = vset.pattern.permute.xlu0 0
        %989 = vperm.xlu0 %988, %v976
        %v990 = vpop.permute.xlu0 %989
        %991 = vset.pattern.permute.xlu0 0
        %992 = vperm.xlu0 %991, %v977
        %v993 = vpop.permute.xlu0 %992
        %v994 = vlaneseq
        %v995 = vshrl.u32 %v994, 7
        %v996 = vsub.s32 %v629, %v995
        %v997 = vrot.slane %v984, %v996
        %v998 = vlaneseq
        %v999 = vshrl.u32 %v998, 7
        %v1000 = vsub.s32 %v634, %v999
        %v1001 = vrot.slane %v987, %v1000
        %v1002 = vsel %vm639, %v1001, %v997
        %v1003 = vlaneseq
        %v1004 = vshrl.u32 %v1003, 7
        %v1005 = vsub.s32 %v629, %v1004
        %v1006 = vrot.slane %v990, %v1005
        %v1007 = vlaneseq
        %v1008 = vshrl.u32 %v1007, 7
        %v1009 = vsub.s32 %v634, %v1008
        %v1010 = vrot.slane %v993, %v1009
        %v1011 = vsel %vm639, %v1010, %v1006
        %v1012 = vsel %vm243, %v1011, %v1002
        %1014 = vst.msk [vmem:[%s198] sm:$0x3] %vm652, %v1012
        %s1015 = sand.u32 %s94, 1
        %s1016 = scalar_lea.sflag [#allocation4], %s1015
        %s1017 = sand.u32 %s94, 1
        %s1018 = smul.addr %s1017, 2
        %s1019 = scalar_lea.vmem [#allocation7], %s1018
        // Predicated region
        $region37: #{tpu_custom_call.1} parent=27 // pred_check
          %p1020 = pneg %p104
        $region38: #{tpu_custom_call.1} parent=27 // pred_check_branch
          %1022 = sbr.rel (%p1020) target = $region40
        $region39: #{tpu_custom_call.1} parent=27 // pred_region
          %s1024 = ssub.s32 32, 32
          %1025 = vsyncadd %s1016, %s1024
          %s1026 = sadd.s32 %s25, %s24
          %s1027 = smul.addr %s1026, 32
          %s1028 = scalar_lea.hbm %s2, %s1027
          %s1030 = sshll.u32 %s1019, 4
          %s1031 = int_to_ptr.vmem [resolvable:$true] %s1030
          %1033 = dma.vmem_to_hbm [thread:$0]  %s1031, 32, %s1028, %s1016
        $region40: #{tpu_custom_call.1} parent=27 // pred_fallthru
          _
      $region28: #{tpu_custom_call.1} parent=5 // pred_fallthru
        _
      %p1034 = scmp.le.s32.totalorder 2, %s15
      // Predicated region
      $region41: #{tpu_custom_call.1} parent=5 // pred_check
        %p1035 = pneg %p1034
      $region42: #{tpu_custom_call.1} parent=5 // pred_check_branch
        %1037 = sbr.rel (%p1035) target = $region44
      $region43: #{tpu_custom_call.1} parent=5 // pred_region
        %s1038 = ssub.s32 %s15, 2
        // Predicated region
        $region45: #{tpu_custom_call.1} parent=43 // pred_check
          %p1039 = pneg %p110
        $region46: #{tpu_custom_call.1} parent=43 // pred_check_branch
          %1041 = sbr.rel (%p1039) target = $region48
        $region47: #{tpu_custom_call.1} parent=43 // pred_region
          %s1042 = sand.u32 %s95, 1
          %s1043 = scalar_lea.sflag [#allocation4], %s1042
          %s1044 = sand.u32 %s95, 1
          %s1045 = smul.addr %s1044, 2
          %s1046 = scalar_lea.vmem [#allocation7], %s1045
          %1047 = dma.done %s1043, 32
        $region48: #{tpu_custom_call.1} parent=43 // pred_fallthru
          _
      $region44: #{tpu_custom_call.1} parent=5 // pred_fallthru
        _
    $region6: #{tpu_custom_call.1} parent=1 // loop_footer
      %s19 = sadd.s32 1, %s15
    $region7: #{tpu_custom_call.1} parent=1 // loop_footer_branch
      %14 = sbr.rel target = $region3
    $region8: #{tpu_custom_call.1} parent=1 // loop_exit
      _
    %1048 = vsyncpa [#allocation3], 1
    %s1049 = scalar_lea.sflag [#allocation3], 1
    %1050 = vsyncpa %s1049, 1
    %1051 = vsyncpa [#allocation6], 1
    %s1052 = scalar_lea.sflag [#allocation6], 1
    %1053 = vsyncpa %s1052, 1
    %1054 = vsyncpa [#allocation4], 1
    %s1055 = scalar_lea.sflag [#allocation4], 1
    %1056 = vsyncpa %s1055, 1

</llo_original>
